<compile_context>
chip_gen: v5e
topology: v5e:2x2
jax: 0.10.0
libtpu: 0.0.40
codegen_flags: <defaults>
</compile_context>

<pallas_src>
import functools

import jax
import jax.numpy as jnp
from jax import lax
from jax.experimental import pallas as pl
from jax.experimental.pallas import tpu as pltpu


# ----------------------------------------------------------------- helpers
def _ceil_to(x, m):
    return ((x + m - 1) // m) * m


def _pad_axis(x, axis, target):
    if x.shape[axis] == target:
        return x
    pad = [(0, 0)] * x.ndim
    pad[axis] = (0, target - x.shape[axis])
    return jnp.pad(x, pad)


def _matmul_precision(compute_dtype):
    # HIGHEST (exact multi-pass f32) only for the f32 validation path; bf16
    # operands are a native single-pass MXU op, DEFAULT is already exact there.
    return (lax.Precision.HIGHEST if compute_dtype == jnp.float32
            else lax.Precision.DEFAULT)


# ------------------------------------------------------------------ kernel 1
def _mlp_kernel(x_ref, w_ref, b_ref, o_ref, acc_ref, *, precision):
    # y = relu(x @ W + b), K-tiled: f32 VMEM accumulator, bias/ReLU epilogue
    # only on the last K step.
    k = pl.program_id(1)

    @pl.when(k == 0)
    def _():
        acc_ref[...] = jnp.zeros_like(acc_ref)

    acc_ref[...] += jnp.dot(x_ref[...], w_ref[...],
                            preferred_element_type=jnp.float32,
                            precision=precision)

    @pl.when(k == pl.num_programs(1) - 1)
    def _():
        o_ref[...] = jnp.maximum(acc_ref[...] + b_ref[...], 0.0)


def image_embedder(x, w, b, *, block_b=256, block_k=512,
                   compute_dtype=jnp.bfloat16):
    """relu(x @ w + b), tiled over batch rows and the feat_dim reduction.

    Returns PADDED (Bp, Ep) f32.  block_b/block_k must be multiples of
    128 (use block_b=128 on v5e).
    """
    B, F = x.shape
    E = w.shape[1]
    Ep = _ceil_to(E, 128)
    Bm = min(block_b, _ceil_to(B, 16))     # 16-row sublane alignment for bf16
    Bp = _ceil_to(B, Bm)
    Fk = min(block_k, _ceil_to(F, 128))
    Fp = _ceil_to(F, Fk)

    xp = _pad_axis(_pad_axis(x, 0, Bp), 1, Fp).astype(compute_dtype)
    wp = _pad_axis(_pad_axis(w, 0, Fp), 1, Ep).astype(compute_dtype)
    bp = _pad_axis(b.reshape(1, E).astype(jnp.float32), 1, Ep)

    return pl.pallas_call(
        functools.partial(_mlp_kernel, precision=_matmul_precision(compute_dtype)),
        out_shape=jax.ShapeDtypeStruct((Bp, Ep), jnp.float32),
        grid=(Bp // Bm, Fp // Fk),          # reduction axis last
        in_specs=[
            pl.BlockSpec((Bm, Fk), lambda i, k: (i, k)),
            pl.BlockSpec((Fk, Ep), lambda i, k: (k, 0)),
            pl.BlockSpec((1, Ep), lambda i, k: (0, 0)),
        ],
        out_specs=pl.BlockSpec((Bm, Ep), lambda i, k: (i, 0)),
        scratch_shapes=[pltpu.VMEM((Bm, Ep), jnp.float32)],
        compiler_params=pltpu.CompilerParams(
            dimension_semantics=("parallel", "arbitrary")),
    )(xp, wp, bp)


# ------------------------------------------------------------------ kernel 2
def _compose_kernel(obj_ref, w_ref, o_ref, *, precision):
    # composed[o, a*E + d] = relu(sum_k obj[o, k] * ops[a, d, k])
    # RHS already K-major -> plain contraction on dim 0, no in-kernel transpose.
    y = jnp.dot(obj_ref[...], w_ref[...],
                preferred_element_type=jnp.float32, precision=precision)
    o_ref[...] = jnp.maximum(y, 0.0)


def compose_all(attr_ops, obj_emb, *, block_n=512, compute_dtype=jnp.bfloat16):
    """relu(obj_emb @ attr_ops[a].T) for every (object, attribute).

    One fused (Op, Ep) x (Ep, A*Ep) GEMM, N-tiled over attribute columns, so
    the per-step pipeline overhead of A tiny GEMMs is gone and each E x E
    operator is read from HBM exactly once.  Returns PADDED (Op, A, Ep) f32
    (object-major so the per-pair gather is composed[objs, attrs]).
    """
    A, E, _ = attr_ops.shape
    O = obj_emb.shape[0]
    Ep = _ceil_to(E, 128)
    Op = _ceil_to(O, 16)
    AEp = A * Ep

    # W[k, a*Ep + d] = ops[a, d, k]  (one-time host/XLA-side transpose).
    ops_p = jnp.pad(attr_ops, ((0, 0), (0, Ep - E), (0, Ep - E)))
    w = jnp.transpose(ops_p, (2, 0, 1)).reshape(Ep, AEp).astype(compute_dtype)
    obj_p = jnp.pad(obj_emb, ((0, Op - O), (0, Ep - E))).astype(compute_dtype)

    bn = min(block_n, AEp)
    while AEp % bn:                       # keep bn a multiple of 128 dividing AEp
        bn -= 128

    flat = pl.pallas_call(
        functools.partial(_compose_kernel,
                          precision=_matmul_precision(compute_dtype)),
        out_shape=jax.ShapeDtypeStruct((Op, AEp), jnp.float32),
        grid=(AEp // bn,),
        in_specs=[
            pl.BlockSpec((Op, Ep), lambda j: (0, 0)),
            pl.BlockSpec((Ep, bn), lambda j: (0, j)),
        ],
        out_specs=pl.BlockSpec((Op, bn), lambda j: (0, j)),
        compiler_params=pltpu.CompilerParams(
            dimension_semantics=("parallel",)),
    )(obj_p, w)
    return flat.reshape(Op, A, Ep)


# ------------------------------------------------------------------ kernel 3
def _score_kernel(img_ref, peT_ref, psq_ref, o_ref, *, precision):
    # score[b, p] = -||img[b] - pair[p]||^2 = 2*img.pair - ||img||^2 - ||pair||^2
    # Dominant B*P*E term runs on the MXU; no (B,P,E) diff cube is built.
    img = img_ref[...]                                 # (Bm, Ep)
    g = jnp.dot(img, peT_ref[...],                     # (Bm, Pn), K-major RHS
                preferred_element_type=jnp.float32, precision=precision)
    imgf = img.astype(jnp.float32)
    img_sq = jnp.sum(imgf * imgf, axis=-1, keepdims=True)   # VPU filler
    o_ref[...] = 2.0 * g - img_sq - psq_ref[...]             # psq: (1, Pn) f32


def pairwise_neg_sqdist(img_feats_p, pair_embeds, *, block_b=256, block_p=256,
                        compute_dtype=jnp.bfloat16):
    """score[b, p] = -||img[b] - pair[p]||^2 via the MXU matmul form.

    img_feats_p is already batch/E padded (output of image_embedder).
    Returns PADDED (Bp, Pp); caller slices to (B, P).  Use 128 tiles on v5e.
    """
    Bp, Ep = img_feats_p.shape
    P, Epe = pair_embeds.shape

    Pn = min(block_p, _ceil_to(P, 128))
    # Split the pair axis into >=2 tiles when possible so a 'parallel' grid
    # axis has work for both v7x TensorCores even at small batch.
    if _ceil_to(P, 128) <= Pn and Pn % 256 == 0:
        Pn //= 2
    Pp = _ceil_to(P, Pn)
    Bm = min(block_b, Bp)
    assert Bp % Bm == 0 and Pp % Pn == 0

    pe_p = jnp.pad(pair_embeds, ((0, Pp - P), (0, Ep - Epe)))
    # ||pair||^2 computed once in f32 (not per B-tile), streamed in lane-dense.
    psq = jnp.sum(pe_p * pe_p, axis=-1).reshape(1, Pp)
    peT = pe_p.T.astype(compute_dtype)                  # (Ep, Pp) K-major RHS
    img_c = img_feats_p.astype(compute_dtype)

    return pl.pallas_call(
        functools.partial(_score_kernel,
                          precision=_matmul_precision(compute_dtype)),
        out_shape=jax.ShapeDtypeStruct((Bp, Pp), jnp.float32),
        grid=(Bp // Bm, Pp // Pn),
        in_specs=[
            pl.BlockSpec((Bm, Ep), lambda i, j: (i, 0)),
            pl.BlockSpec((Ep, Pn), lambda i, j: (0, j)),
            pl.BlockSpec((1, Pn), lambda i, j: (0, j)),
        ],
        out_specs=pl.BlockSpec((Bm, Pn), lambda i, j: (i, j)),
        compiler_params=pltpu.CompilerParams(
            dimension_semantics=("parallel", "parallel")),
    )(img_c, peT, psq)


# ------------------------------------------------------------------ model glue
def attribute_operator_val_forward(img, params, val_attrs, val_objs,
                                   *, compute_dtype=jnp.bfloat16):
    """Eval forward (val_forward_distance_fast): returns score (B, num_pairs)."""
    B = img.shape[0]
    P = val_attrs.shape[0]
    # 1) image_embedder MLP (Pallas kernel 1, MXU, K-tiled).
    img_feats = image_embedder(img, params["mlp_w"], params["mlp_b"],
                               compute_dtype=compute_dtype)          # (Bp, Ep)
    # 2) compose: one fused GEMM over all (object, attribute) combinations
    #    (kernel 2), then a cheap (P, Ep) gather of the requested pairs in JAX.
    composed = compose_all(params["attr_ops"], params["obj_emb"],
                           compute_dtype=compute_dtype)              # (Op, A, Ep)
    # TODO(synk): for CZSL-scale pair sets, fuse this gather into the score
    # kernel via PrefetchScalarGridSpec (val_attrs/val_objs in SMEM) to avoid
    # the extra HBM round trip; negligible at this pair count.
    pair_embeds = composed[val_objs, val_attrs]                      # (P, Ep) f32
    # 3) -||img_feat - pair_embed||^2 score (Pallas kernel 3, MXU matmul form).
    score_p = pairwise_neg_sqdist(img_feats, pair_embeds,
                                  compute_dtype=compute_dtype)       # (Bp, Pp)
    return score_p[:B, :P]


def _reference_forward(img, params, val_attrs, val_objs):
    # Exact-f32 reference; matmul precision scoped here only (no global mutation).
    with jax.default_matmul_precision("highest"):
        img_feats = jnp.maximum(img @ params["mlp_w"] + params["mlp_b"], 0.0)
        ops = params["attr_ops"][val_attrs]
        rep = params["obj_emb"][val_objs]
        pair_embeds = jnp.maximum(jnp.einsum("pdk,pk->pd", ops, rep), 0.0)
        diff = img_feats[:, None, :] - pair_embeds[None, :, :]
        return -jnp.sum(diff * diff, axis=-1)


if __name__ == "__main__":
    # Small synthetic "dataset" consistent with the module's __init__ shapes,
    # sized so the score grid has >1 tile along the pair axis.
    batch = 16
    feat_dim = 256
    emb_dim = 128
    num_attrs = 8
    num_objs = 20
    # dset.pairs -> full attr x obj grid (160 pairs).
    aa, oo = jnp.meshgrid(jnp.arange(num_attrs), jnp.arange(num_objs), indexing="ij")
    val_attrs = aa.reshape(-1).astype(jnp.int32)
    val_objs = oo.reshape(-1).astype(jnp.int32)

    key = jax.random.PRNGKey(0)
    k_img, k_w, k_b, k_obj, k_ops = jax.random.split(key, 5)

    # Deterministic synthetic parameters (module gives shapes; not a checkpoint).
    # attr_ops in the module are initialized to eye(emb_dim); add a small
    # deterministic perturbation so the compose GEMM is non-trivial.
    params = {
        "mlp_w": jax.random.normal(k_w, (feat_dim, emb_dim), jnp.float32) * 0.1,
        "mlp_b": jax.random.normal(k_b, (emb_dim,), jnp.float32) * 0.1,
        "obj_emb": jax.random.normal(k_obj, (num_objs, emb_dim), jnp.float32),
        "attr_ops": jnp.eye(emb_dim, dtype=jnp.float32)[None]
        + 0.05 * jax.random.normal(k_ops, (num_attrs, emb_dim, emb_dim), jnp.float32),
    }
    img = jax.random.normal(k_img, (batch, feat_dim), jnp.float32)

    ref = _reference_forward(img, params, val_attrs, val_objs)

    # Production path: bf16 MXU operands (single-pass matmuls), f32 epilogues.
    # bf16 operand rounding + the 2ab-a^2-b^2 form => looser (ranking-grade)
    # tolerance vs the exact-f32 reference.
    score = attribute_operator_val_forward(img, params, val_attrs, val_objs)
    score = jax.block_until_ready(score)
    assert score.shape == (batch, val_attrs.shape[0])
    assert jnp.allclose(score, ref, atol=1.0, rtol=2e-2), "bf16 mismatch vs reference"

    # Exact-f32 path (precision=HIGHEST scoped to the in-kernel dots only) for
    # a tight numerical check of the kernel structure.
    score_f32 = attribute_operator_val_forward(img, params, val_attrs, val_objs,
                                               compute_dtype=jnp.float32)
    score_f32 = jax.block_until_ready(score_f32)
    assert jnp.allclose(score_f32, ref, atol=2e-3, rtol=2e-3), "f32 mismatch vs reference"

    # TODO(synk): training-path losses (triplet margin, BCE, inverse/commutative/
    # antonym regularizers) and glove embedding init are host-side composition,
    # not part of the eval forward hot path; not implemented as kernels.
    print("KERNEL_OK")
</pallas_src>

<mosaic_0001>
module attributes {stable_mosaic.version = 11 : i64} {
  func.func @_mlp_kernel(%arg0: i32, %arg1: i32, %arg2: memref<16x256xbf16, #tpu.memory_space<vmem>>, %arg3: memref<256x128xbf16, #tpu.memory_space<vmem>>, %arg4: memref<1x128xf32, #tpu.memory_space<vmem>>, %arg5: memref<16x128xf32, #tpu.memory_space<vmem>>, %arg6: memref<16x128xf32, #tpu.memory_space<vmem>>) attributes {dimension_semantics = [#tpu.dimension_semantics<parallel>, #tpu.dimension_semantics<arbitrary>], iteration_bounds = array<i64: 1, 1>, scalar_prefetch = 0 : i64, scratch_operands = 1 : i64, tpu.core_type = #tpu.core_type<tc>, window_params = [{transform_indices = @transform_0, window_bounds = array<i64: 16, 256>}, {transform_indices = @transform_1, window_bounds = array<i64: 256, 128>}, {pipeline_mode = #tpu.pipeline_mode<synchronous>, transform_indices = @transform_2, window_bounds = array<i64: 1, 128>}, {transform_indices = @transform_3, window_bounds = array<i64: 16, 128>}]} {
    %c0_i32 = arith.constant 0 : i32
    %0 = arith.cmpi eq, %arg1, %c0_i32 : i32
    %1 = arith.extui %0 : i1 to i32
    %c0_i32_0 = arith.constant 0 : i32
    %2 = arith.cmpi ne, %1, %c0_i32_0 : i32
    scf.if %2 {
      %cst_10 = arith.constant 0.000000e+00 : f32
      %12 = vector.broadcast %cst_10 : f32 to vector<16x128xf32>
      %c0_11 = arith.constant 0 : index
      %c0_12 = arith.constant 0 : index
      %13 = vector.load %arg6[%c0_11, %c0_12] : memref<16x128xf32, #tpu.memory_space<vmem>>, vector<16x128xf32>
      tpu.vector_store %arg6[%c0_11, %c0_12], %12 {strides = array<i32>} : memref<16x128xf32, #tpu.memory_space<vmem>>, vector<16x128xf32>,
    } else {
    }
    %c0 = arith.constant 0 : index
    %c0_1 = arith.constant 0 : index
    %3 = vector.load %arg6[%c0, %c0_1] : memref<16x128xf32, #tpu.memory_space<vmem>>, vector<16x128xf32>
    %c0_2 = arith.constant 0 : index
    %c0_3 = arith.constant 0 : index
    %4 = vector.load %arg2[%c0_2, %c0_3] : memref<16x256xbf16, #tpu.memory_space<vmem>>, vector<16x256xbf16>
    %c0_4 = arith.constant 0 : index
    %c0_5 = arith.constant 0 : index
    %5 = vector.load %arg3[%c0_4, %c0_5] : memref<256x128xbf16, #tpu.memory_space<vmem>>, vector<256x128xbf16>
    %cst = arith.constant dense<0.000000e+00> : vector<16x128xf32>
    %6 = tpu.matmul %4, %5, %cst {dimension_numbers = #tpu.dot_dimension_numbers<[1], [0], [0], [1], [0, 0, 1, 1], [], []>} : vector<16x256xbf16>, vector<256x128xbf16>, vector<16x128xf32> -> vector<16x128xf32>
    %7 = arith.addf %3, %6 : vector<16x128xf32>
    %c0_6 = arith.constant 0 : index
    %c0_7 = arith.constant 0 : index
    %8 = vector.load %arg6[%c0_6, %c0_7] : memref<16x128xf32, #tpu.memory_space<vmem>>, vector<16x128xf32>
    tpu.vector_store %arg6[%c0_6, %c0_7], %7 {strides = array<i32>} : memref<16x128xf32, #tpu.memory_space<vmem>>, vector<16x128xf32>,
    %c0_i32_8 = arith.constant 0 : i32
    %9 = arith.cmpi eq, %arg1, %c0_i32_8 : i32
    %10 = arith.extui %9 : i1 to i32
    %c0_i32_9 = arith.constant 0 : i32
    %11 = arith.cmpi ne, %10, %c0_i32_9 : i32
    scf.if %11 {
      %c0_10 = arith.constant 0 : index
      %c0_11 = arith.constant 0 : index
      %12 = vector.load %arg6[%c0_10, %c0_11] : memref<16x128xf32, #tpu.memory_space<vmem>>, vector<16x128xf32>
      %c0_12 = arith.constant 0 : index
      %c0_13 = arith.constant 0 : index
      %13 = vector.load %arg4[%c0_12, %c0_13] : memref<1x128xf32, #tpu.memory_space<vmem>>, vector<1x128xf32>
      %14 = vector.broadcast %13 : vector<1x128xf32> to vector<16x128xf32>
      %15 = arith.addf %12, %14 : vector<16x128xf32>
      %cst_14 = arith.constant 0.000000e+00 : f32
      %16 = vector.broadcast %cst_14 : f32 to vector<16x128xf32>
      %17 = arith.maximumf %15, %16 : vector<16x128xf32>
      %c0_15 = arith.constant 0 : index
      %c0_16 = arith.constant 0 : index
      %18 = vector.load %arg5[%c0_15, %c0_16] : memref<16x128xf32, #tpu.memory_space<vmem>>, vector<16x128xf32>
      tpu.vector_store %arg5[%c0_15, %c0_16], %17 {strides = array<i32>} : memref<16x128xf32, #tpu.memory_space<vmem>>, vector<16x128xf32>,
    } else {
    }
    return
  }
  func.func @transform_0(%arg0: i32, %arg1: i32) -> (i32, i32) {
    %c0_i32 = arith.constant 0 : i32
    return %arg0, %arg1 : i32, i32
  }
  func.func @transform_1(%arg0: i32, %arg1: i32) -> (i32, i32) {
    %c0_i32 = arith.constant 0 : i32
    %c0_i32_0 = arith.constant 0 : i32
    return %arg1, %c0_i32 : i32, i32
  }
  func.func @transform_2(%arg0: i32, %arg1: i32) -> (i32, i32) {
    %c0_i32 = arith.constant 0 : i32
    %c0_i32_0 = arith.constant 0 : i32
    %c0_i32_1 = arith.constant 0 : i32
    return %c0_i32, %c0_i32_0 : i32, i32
  }
  func.func @transform_3(%arg0: i32, %arg1: i32) -> (i32, i32) {
    %c0_i32 = arith.constant 0 : i32
    %c0_i32_0 = arith.constant 0 : i32
    return %arg0, %c0_i32 : i32, i32
  }
}

</mosaic_0001>

<llo_original>
// kernel: tpu_custom_call.1
$region0: #{tpu_custom_call.1}
  #allocation0 [shape = 'u32[]', space=smem, size = 0x4, offset = 0x4, fixed_abs, tag = 'smem constant byte address 0x4 - core index']
  #allocation1 [shape = 'u32[72,128]{1,0:T(1,128)}', space=vmem, size = 0x9000, scoped, tag = 'internal scratch']
  #allocation2 [shape = 'f32[16,128]{1,0:T(8,128)}', space=vmem, size = 0x2000, scoped, tag = 'scratch operand']
  %s0 = inlined_call_operand.hbm [shape: bf16[16,256], index: 0, kind: input, shape index: {}]
  %s1 = inlined_call_operand.hbm [shape: bf16[256,128], index: 1, kind: input, shape index: {}]
  %s2 = inlined_call_operand.vmem [shape: f32[1,128], index: 2, kind: input, shape index: {}]
  %s3 = inlined_call_operand.hbm [shape: f32[16,128], index: 3, kind: output, shape index: {}]
  %s4 = sld [smem:[#allocation0]]
  $region38: #{tpu_custom_call.1} parent=0
    _
  %s6 = ssub.s32 1, %s4
  %s7 = scalar_select 0, %s6, %s4
  $region1: #{tpu_custom_call.1} parent=0
    #allocation3 [shape = 'u8[8192]{0}', space=vmem, size = 0x2000, scoped, tag = 'input window, operand 0, single buffered']
    #allocation4 [shape = 's32[1]{0}', space=sflag, size = 0x4, scoped, tag = 'scoped memory for tpu_custom_call.1']
    #allocation5 [shape = 's32[1]{0}', space=sflag, size = 0x4, scoped, tag = 'scoped memory for tpu_custom_call.1']
    #allocation6 [shape = 'u8[65536]{0}', space=vmem, size = 0x10000, scoped, tag = 'input window, operand 1, single buffered']
    #allocation7 [shape = 's32[1]{0}', space=sflag, size = 0x4, scoped, tag = 'scoped memory for tpu_custom_call.1']
    #allocation8 [shape = 'u8[8192]{0}', space=vmem, size = 0x2000, scoped, tag = 'output window, operand 0, single buffered']
    %8 = vsyncpa [#allocation4], 0
    %9 = vsyncpa [#allocation7], 0
    %10 = vsyncpa [#allocation5], 0
    // Predicated region
    $region2: #{tpu_custom_call.1} parent=1 // pred_check
      _
    $region3: #{tpu_custom_call.1} parent=1 // pred_check_branch
      %12 = sbr.rel (0) target = $region5
    $region4: #{tpu_custom_call.1} parent=1 // pred_region
      %14 = vsyncadd [#allocation4], 0
      %s15 = sshll.u32 %s0, 4
      %s16 = int_to_ptr.hbm [resolvable:$true] %s15
      %s17 = sshll.u32 [#allocation3], 4
      %s18 = int_to_ptr.vmem [resolvable:$true] %s17
      %23 = dma.hbm_to_vmem [thread:$0]  %s16, 256, %s18, [#allocation4], 128, 128, 8
    $region5: #{tpu_custom_call.1} parent=1 // pred_fallthru
      _
    // Predicated region
    $region6: #{tpu_custom_call.1} parent=1 // pred_check
      _
    $region7: #{tpu_custom_call.1} parent=1 // pred_check_branch
      %25 = sbr.rel (0) target = $region9
    $region8: #{tpu_custom_call.1} parent=1 // pred_region
      %27 = vsyncadd [#allocation7], 0
      %s28 = sshll.u32 %s1, 4
      %s29 = int_to_ptr.hbm [resolvable:$true] %s28
      %s30 = sshll.u32 [#allocation6], 4
      %s31 = int_to_ptr.vmem [resolvable:$true] %s30
      %36 = dma.hbm_to_vmem [thread:$0]  %s29, 2048, %s31, [#allocation7], 64, 64, 4
    $region9: #{tpu_custom_call.1} parent=1 // pred_fallthru
      _
    // Predicated region
    $region10: #{tpu_custom_call.1} parent=1 // pred_check
      _
    $region11: #{tpu_custom_call.1} parent=1 // pred_check_branch
      %38 = sbr.rel (0) target = $region13
    $region12: #{tpu_custom_call.1} parent=1 // pred_region
      _
    $region13: #{tpu_custom_call.1} parent=1 // pred_fallthru
      _
    // Predicated region
    $region14: #{tpu_custom_call.1} parent=1 // pred_check
      _
    $region15: #{tpu_custom_call.1} parent=1 // pred_check_branch
      %40 = sbr.rel (0) target = $region17
    $region16: #{tpu_custom_call.1} parent=1 // pred_region
      %42 = dma.done [#allocation4], 256
    $region17: #{tpu_custom_call.1} parent=1 // pred_fallthru
      _
    // Predicated region
    $region18: #{tpu_custom_call.1} parent=1 // pred_check
      _
    $region19: #{tpu_custom_call.1} parent=1 // pred_check_branch
      %44 = sbr.rel (0) target = $region21
    $region20: #{tpu_custom_call.1} parent=1 // pred_region
      %46 = dma.done [#allocation7], 2048
    $region21: #{tpu_custom_call.1} parent=1 // pred_fallthru
      _
    %p47 = scmp.eq.s32.totalorder 0, 0
    // Predicated region
    $region22: #{tpu_custom_call.1} parent=1 // pred_check
      %p48 = pneg %p47
    $region23: #{tpu_custom_call.1} parent=1 // pred_check_branch
      %50 = sbr.rel (%p48) target = $region25
    $region24: #{tpu_custom_call.1} parent=1 // pred_region
      %51 = vst [vmem:[#allocation2] sm:$0xff] 0.0
      %52 = vst [vmem:[#allocation2 + $0x8] sm:$0xff] 0.0
    $region25: #{tpu_custom_call.1} parent=1 // pred_fallthru
      _
    %v53 = vld [vmem:[#allocation2] sm:$0xff]
    %v54 = vld [vmem:[#allocation2 + $0x8] sm:$0xff]
    %v55 = vld [vmem:[#allocation3] sm:$0xff]
    %v56 = vld [vmem:[#allocation3 + $0x8] sm:$0xff]
    %v57 = vld [vmem:[#allocation6] sm:$0xf]
    %v58 = vld [vmem:[#allocation6 + $0x4] sm:$0xf]
    %v59 = vld [vmem:[#allocation6 + $0x8] sm:$0xf]
    %v60 = vld [vmem:[#allocation6 + $0xc] sm:$0xf]
    %v61 = vld [vmem:[#allocation6 + $0x10] sm:$0xf]
    %v62 = vld [vmem:[#allocation6 + $0x14] sm:$0xf]
    %v63 = vld [vmem:[#allocation6 + $0x18] sm:$0xf]
    %v64 = vld [vmem:[#allocation6 + $0x1c] sm:$0xf]
    %v65 = vld [vmem:[#allocation6 + $0x20] sm:$0xf]
    %v66 = vld [vmem:[#allocation6 + $0x24] sm:$0xf]
    %v67 = vld [vmem:[#allocation6 + $0x28] sm:$0xf]
    %v68 = vld [vmem:[#allocation6 + $0x2c] sm:$0xf]
    %v69 = vld [vmem:[#allocation6 + $0x30] sm:$0xf]
    %v70 = vld [vmem:[#allocation6 + $0x34] sm:$0xf]
    %v71 = vld [vmem:[#allocation6 + $0x38] sm:$0xf]
    %v72 = vld [vmem:[#allocation6 + $0x3c] sm:$0xf]
    %v73 = vld [vmem:[#allocation6 + $0x40] sm:$0xf]
    %v74 = vld [vmem:[#allocation6 + $0x44] sm:$0xf]
    %v75 = vld [vmem:[#allocation6 + $0x48] sm:$0xf]
    %v76 = vld [vmem:[#allocation6 + $0x4c] sm:$0xf]
    %v77 = vld [vmem:[#allocation6 + $0x50] sm:$0xf]
    %v78 = vld [vmem:[#allocation6 + $0x54] sm:$0xf]
    %v79 = vld [vmem:[#allocation6 + $0x58] sm:$0xf]
    %v80 = vld [vmem:[#allocation6 + $0x5c] sm:$0xf]
    %v81 = vld [vmem:[#allocation6 + $0x60] sm:$0xf]
    %v82 = vld [vmem:[#allocation6 + $0x64] sm:$0xf]
    %v83 = vld [vmem:[#allocation6 + $0x68] sm:$0xf]
    %v84 = vld [vmem:[#allocation6 + $0x6c] sm:$0xf]
    %v85 = vld [vmem:[#allocation6 + $0x70] sm:$0xf]
    %v86 = vld [vmem:[#allocation6 + $0x74] sm:$0xf]
    %v87 = vld [vmem:[#allocation6 + $0x78] sm:$0xf]
    %v88 = vld [vmem:[#allocation6 + $0x7c] sm:$0xf]
    %v91 = vunpack.c.l.b16 %v55
    %v92 = vunpack.c.h.b16 %v55
    %v93 = vunpack.c.l.b16 %v56
    %v94 = vunpack.c.h.b16 %v56
    %v95 = vpack.c.b16 %v93, %v91
    %v96 = vpack.c.b16 %v94, %v92
    %v131 = vunpack.c.l.b16 %v57
    %v132 = vunpack.c.l.b16 %v58
    %v133 = vunpack.c.l.b16 %v59
    %v134 = vunpack.c.l.b16 %v60
    %v135 = vunpack.c.l.b16 %v61
    %v136 = vunpack.c.l.b16 %v62
    %v137 = vunpack.c.l.b16 %v63
    %v138 = vunpack.c.l.b16 %v64
    %v139 = vunpack.c.l.b16 %v65
    %v140 = vunpack.c.l.b16 %v66
    %v141 = vunpack.c.l.b16 %v67
    %v142 = vunpack.c.l.b16 %v68
    %v143 = vunpack.c.l.b16 %v69
    %v144 = vunpack.c.l.b16 %v70
    %v145 = vunpack.c.l.b16 %v71
    %v146 = vunpack.c.l.b16 %v72
    %v147 = vunpack.c.l.b16 %v73
    %v148 = vunpack.c.l.b16 %v74
    %v149 = vunpack.c.l.b16 %v75
    %v150 = vunpack.c.l.b16 %v76
    %v151 = vunpack.c.l.b16 %v77
    %v152 = vunpack.c.l.b16 %v78
    %v153 = vunpack.c.l.b16 %v79
    %v154 = vunpack.c.l.b16 %v80
    %v155 = vunpack.c.l.b16 %v81
    %v156 = vunpack.c.l.b16 %v82
    %v157 = vunpack.c.l.b16 %v83
    %v158 = vunpack.c.l.b16 %v84
    %v159 = vunpack.c.l.b16 %v85
    %v160 = vunpack.c.l.b16 %v86
    %v161 = vunpack.c.l.b16 %v87
    %v162 = vunpack.c.l.b16 %v88
    %v163 = vpack.c.b16 %v132, %v131
    %v164 = vpack.c.b16 %v134, %v133
    %v165 = vpack.c.b16 %v136, %v135
    %v166 = vpack.c.b16 %v138, %v137
    %v167 = vpack.c.b16 %v140, %v139
    %v168 = vpack.c.b16 %v142, %v141
    %v169 = vpack.c.b16 %v144, %v143
    %v170 = vpack.c.b16 %v146, %v145
    %v171 = vpack.c.b16 %v148, %v147
    %v172 = vpack.c.b16 %v150, %v149
    %v173 = vpack.c.b16 %v152, %v151
    %v174 = vpack.c.b16 %v154, %v153
    %v175 = vpack.c.b16 %v156, %v155
    %v176 = vpack.c.b16 %v158, %v157
    %v177 = vpack.c.b16 %v160, %v159
    %v178 = vpack.c.b16 %v162, %v161
    %195 = vmatpush.bf16.msra.mxu0 %v170
    %196 = vmatpush.bf16.msra.mxu0 %v169
    %197 = vmatpush.bf16.msra.mxu0 %v168
    %198 = vmatpush.bf16.msra.mxu0 %v167
    %199 = vmatpush.bf16.msra.mxu0 %v166
    %200 = vmatpush.bf16.msra.mxu0 %v165
    %201 = vmatpush.bf16.msra.mxu0 %v164
    %202 = vmatpush.bf16.msra.mxu0 %v163
    %203 = vmatmul.bf16.gmra.mxu0 %v95
    %v204 = vpop.f32.mrf.mxu0
    %v205 = vadd.f32 0.0, %v204
    %v206 = vpop.f32.mrf.mxu0
    %v207 = vadd.f32 0.0, %v206
    %208 = vdwg.mxu0
    %209 = vmatpush.bf16.msra.mxu0 %v178
    %210 = vmatpush.bf16.msra.mxu0 %v177
    %211 = vmatpush.bf16.msra.mxu0 %v176
    %212 = vmatpush.bf16.msra.mxu0 %v175
    %213 = vmatpush.bf16.msra.mxu0 %v174
    %214 = vmatpush.bf16.msra.mxu0 %v173
    %215 = vmatpush.bf16.msra.mxu0 %v172
    %216 = vmatpush.bf16.msra.mxu0 %v171
    %217 = vmatmul.bf16.gmra.mxu0 %v96
    %v218 = vpop.f32.mrf.mxu0
    %v219 = vadd.f32 %v205, %v218
    %v220 = vpop.f32.mrf.mxu0
    %v221 = vadd.f32 %v207, %v220
    %222 = vdwg.mxu0
    %v223 = vadd.f32 %v53, %v219
    %v224 = vadd.f32 %v54, %v221
    %225 = vst [vmem:[#allocation2] sm:$0xff] %v223
    %226 = vst [vmem:[#allocation2 + $0x8] sm:$0xff] %v224
    // Predicated region
    $region26: #{tpu_custom_call.1} parent=1 // pred_check
      %p227 = pneg %p47
    $region27: #{tpu_custom_call.1} parent=1 // pred_check_branch
      %229 = sbr.rel (%p227) target = $region29
    $region28: #{tpu_custom_call.1} parent=1 // pred_region
      %v230 = vld [vmem:[#allocation2] sm:$0xff]
      %v231 = vld [vmem:[#allocation2 + $0x8] sm:$0xff]
      %v232 = vld [vmem:[%s2] sm:$0x1]
      %v234 = vperm.slane %v232, 0
      %v236 = vadd.f32 %v230, %v234
      %v237 = vadd.f32 %v231, %v234
      %v238 = vmax.f32 %v236, 0.0
      %v239 = vmax.f32 %v237, 0.0
      %240 = vst [vmem:[#allocation8] sm:$0xff] %v238
      %241 = vst [vmem:[#allocation8 + $0x8] sm:$0xff] %v239
    $region29: #{tpu_custom_call.1} parent=1 // pred_fallthru
      _
    // Predicated region
    $region30: #{tpu_custom_call.1} parent=1 // pred_check
      _
    $region31: #{tpu_custom_call.1} parent=1 // pred_check_branch
      %243 = sbr.rel (0) target = $region33
    $region32: #{tpu_custom_call.1} parent=1 // pred_region
      %245 = vsyncadd [#allocation5], 0
      %s246 = sshll.u32 [#allocation8], 4
      %s247 = int_to_ptr.vmem [resolvable:$true] %s246
      %s248 = sshll.u32 %s3, 4
      %s249 = int_to_ptr.hbm [resolvable:$true] %s248
      %254 = dma.vmem_to_hbm [thread:$0]  %s247, 256, %s249, [#allocation5], 128, 128, 8
    $region33: #{tpu_custom_call.1} parent=1 // pred_fallthru
      _
    // Predicated region
    $region34: #{tpu_custom_call.1} parent=1 // pred_check
      _
    $region35: #{tpu_custom_call.1} parent=1 // pred_check_branch
      %256 = sbr.rel (0) target = $region37
    $region36: #{tpu_custom_call.1} parent=1 // pred_region
      %258 = dma.done [#allocation5], 256
    $region37: #{tpu_custom_call.1} parent=1 // pred_fallthru
      _
    %259 = vsyncpa [#allocation4], 1
    %260 = vsyncpa [#allocation7], 1
    %261 = vsyncpa [#allocation5], 1

</llo_original>
